<compile_context>
chip_gen: v6e
topology: v6e:2x2x1
jax: 0.10.0
libtpu: 0.0.40
codegen_flags: <defaults>
</compile_context>

<pallas_src>
import jax
import jax.numpy as jnp
import numpy as np
from jax.experimental import pallas as pl
from jax.experimental.pallas import tpu as pltpu

H1, H2, OUT = 256, 128, 2
OUT_PAD = 128                 # lane-dense output slab; sliced to OUT in the wrapper
_NEG_SLOPE = 0.01             # torch.nn.functional.leaky_relu default
_MAX_RESIDENT_K = 2048        # above this, stream w1 over a K grid axis


def _mlp_kernel(gamma_ref,          # SMEM scalar (1, 1) f32
                x_ref,              # (tb, tk)      x dtype (cast in-kernel)
                w1_ref, b1_ref,     # (tk, H1) cdt, (1, H1) f32
                w2_ref, b2_ref,     # (H1, H2) cdt, (1, H2) f32
                w3_ref, b3_ref,     # (H2, OUT_PAD) cdt, (1, OUT_PAD) f32
                o_ref,              # (tb, OUT_PAD) f32
                acc_ref):           # scratch (tb, H1) f32
    k = pl.program_id(1)
    wdt = w1_ref.dtype

    @pl.when(k == 0)
    def _():
        acc_ref[...] = jnp.zeros_like(acc_ref)

    # layer1 partial: cast the x tile on the VPU (hidden under MXU/DMA), f32 accumulate
    acc_ref[...] += jnp.dot(x_ref[...].astype(wdt), w1_ref[...],
                            preferred_element_type=jnp.float32)

    @pl.when(k == pl.num_programs(1) - 1)
    def _():
        neg = jnp.float32(_NEG_SLOPE)

        # finish layer1 + leaky_relu (max(h, 0.01*h): 2 VALU ops)
        h = acc_ref[...] + b1_ref[...]
        h = jnp.maximum(h, neg * h)

        # layer2 + leaky_relu
        h = jnp.dot(h.astype(wdt), w2_ref[...],
                    preferred_element_type=jnp.float32) + b2_ref[...]
        h = jnp.maximum(h, neg * h)

        # output_layer (padded to 128 lanes), scaled by gamma
        out = jnp.dot(h.astype(wdt), w3_ref[...],
                      preferred_element_type=jnp.float32) + b3_ref[...]
        o_ref[...] = (out * gamma_ref[0, 0]).astype(o_ref.dtype)


def _round_up(n, m):
    return (n + m - 1) // m * m


def _choose_tb(batch, tk, x_itemsize, resident_bytes, budget_bytes):
    """Largest MXU-friendly batch tile whose buffers fit the VMEM budget.

    Floor at 128 (at/above bf16's native (16,128) tile, no relayout) and cap so the
    batch grid has >= 2 steps when batch > 128 (pipelining + v7x megacore).
    """
    if batch > 128:
        cap = _round_up((batch + 1) // 2, 128)
    else:
        cap = 128
    for tb in (2048, 1024, 512, 256, 128):
        if tb > cap:
            continue
        x_bytes = 2 * tb * tk * x_itemsize        # double-buffered x tile
        acc_bytes = tb * H1 * 4                   # f32 layer-1 accumulator (scratch)
        act_bytes = tb * (H1 + H2) * 4            # live f32 activations in the epilogue
        out_bytes = 2 * tb * OUT_PAD * 4          # double-buffered output tile
        if resident_bytes + x_bytes + acc_bytes + act_bytes + out_bytes <= budget_bytes:
            return tb
    return 128


def graphing_model_forward(x, params, *, compute_dtype=jnp.bfloat16, tb=None, tk=None):
    """Fused MLP forward. x: (B, genome_size). Returns (B, 2) float32."""
    w1, b1, w2, b2, w3, b3, gamma = params
    x = jnp.asarray(x)
    B, G = x.shape
    assert w1.shape == (G, H1) and w2.shape == (H1, H2) and w3.shape == (H2, OUT)

    cdt = jnp.dtype(compute_dtype)
    xdt = x.dtype                     # x stays in its stored dtype; cast happens in-kernel

    # --- generation-aware VMEM budget ---------------------------------------
    try:
        vmem_cap = int(pltpu.get_tpu_info().vmem_capacity_bytes)
    except Exception:
        vmem_cap = 64 << 20           # conservative fallback (v7x-sized)
    if vmem_cap <= (64 << 20):        # v7x-class: 64 MiB per TensorCore
        budget_bytes, limit_cap = 40 << 20, 48 << 20
    else:                             # v5e / v6e: 128 MiB
        budget_bytes, limit_cap = 100 << 20, 110 << 20

    # --- genome (K) tiling: pad to 128 lanes; stream w1 when G is large -----
    if tk is None:
        g128 = _round_up(G, 128)
        tk = g128 if g128 <= _MAX_RESIDENT_K else 512
    tk = max(128, _round_up(tk, 128))
    Gp = _round_up(G, tk)
    num_k = Gp // tk

    # --- weights (compute dtype, zero-padded to MXU/lane-friendly shapes) ---
    w1c = jnp.pad(jnp.asarray(w1, cdt), ((0, Gp - G), (0, 0)))          # (Gp, H1)
    w2c = jnp.asarray(w2, cdt)                                          # (H1, H2)
    w3c = jnp.pad(jnp.asarray(w3, cdt), ((0, 0), (0, OUT_PAD - OUT)))   # (H2, 128)
    b1c = jnp.asarray(b1, jnp.float32).reshape(1, H1)
    b2c = jnp.asarray(b2, jnp.float32).reshape(1, H2)
    b3c = jnp.pad(jnp.asarray(b3, jnp.float32).reshape(1, OUT),
                  ((0, 0), (0, OUT_PAD - OUT)))
    gammac = jnp.asarray(gamma, jnp.float32).reshape(1, 1)

    # Resident weight/bias footprint (default double-buffering; w1 either streams
    # per k-step or is small enough to sit resident).
    if num_k > 1:
        w1_resident = 2 * tk * H1 * cdt.itemsize
    else:
        w1_resident = 2 * Gp * H1 * cdt.itemsize
    small_resident = 2 * ((H1 * H2 + H2 * OUT_PAD) * cdt.itemsize
                          + (H1 + H2 + OUT_PAD) * 4)
    resident_bytes = w1_resident + small_resident

    # --- batch tile ----------------------------------------------------------
    if tb is None:
        tb = _choose_tb(B, tk, xdt.itemsize, resident_bytes, budget_bytes)
    tb = max(128, _round_up(tb, 128))
    Bp = _round_up(B, tb)

    # Zero-pad batch rows and genome columns (mathematically inert; sliced off below).
    if (Bp, Gp) != (B, G):
        x = jnp.pad(x, ((0, Bp - B), (0, Gp - G)))

    grid = (Bp // tb, num_k)

    # TODO(synk): for very small G / short per-step compute, sweeping
    # pipeline_mode=pl.Buffered(3) on the x spec can hide exposed DMA issue latency.
    in_specs = [
        pl.BlockSpec(memory_space=pltpu.MemorySpace.SMEM),       # gamma (1, 1)
        pl.BlockSpec((tb, tk), lambda i, k: (i, k)),             # x tile
        pl.BlockSpec((tk, H1), lambda i, k: (k, 0)),             # w1, streamed over k
        pl.BlockSpec((1, H1), lambda i, k: (0, 0)),              # b1
        pl.BlockSpec((H1, H2), lambda i, k: (0, 0)),             # w2
        pl.BlockSpec((1, H2), lambda i, k: (0, 0)),              # b2
        pl.BlockSpec((H2, OUT_PAD), lambda i, k: (0, 0)),        # w3 (padded cols)
        pl.BlockSpec((1, OUT_PAD), lambda i, k: (0, 0)),         # b3 (padded cols)
    ]
    out_specs = pl.BlockSpec((tb, OUT_PAD), lambda i, k: (i, 0))

    # Advisory cost for XLA's scheduler.
    flops = 2 * B * (G * H1 + H1 * H2 + H2 * OUT)
    bytes_accessed = (B * G * xdt.itemsize
                      + (Gp * H1 + H1 * H2 + H2 * OUT_PAD) * cdt.itemsize
                      + (H1 + H2 + OUT_PAD) * 4
                      + Bp * OUT_PAD * 4)
    cost = pl.CostEstimate(flops=flops, transcendentals=0,
                           bytes_accessed=bytes_accessed)

    vmem_need = (resident_bytes
                 + 2 * tb * tk * xdt.itemsize
                 + 2 * tb * OUT_PAD * 4
                 + tb * H1 * 4
                 + tb * (H1 + H2) * 4
                 + (2 << 20))                        # headroom / internal scratch
    vmem_limit = int(min(max(vmem_need * 5 // 4, 32 << 20), limit_cap))

    out = pl.pallas_call(
        _mlp_kernel,
        out_shape=jax.ShapeDtypeStruct((Bp, OUT_PAD), jnp.float32),
        grid_spec=pltpu.PrefetchScalarGridSpec(
            num_scalar_prefetch=0,
            grid=grid,
            in_specs=in_specs,
            out_specs=out_specs,
            scratch_shapes=[pltpu.VMEM((tb, H1), jnp.float32)],   # layer-1 accumulator
        ),
        compiler_params=pltpu.CompilerParams(
            dimension_semantics=("parallel", "arbitrary"),
            vmem_limit_bytes=vmem_limit),
        cost_estimate=cost,
    )(gammac, x, w1c, b1c, w2c, b2c, w3c, b3c)

    return out[:B, :OUT]


def init_params(key, genome_size, h1=H1, h2=H2):
    """Parameter init mirroring the PyTorch module's shapes (weights stored (in, out))."""
    k1, k2, k3, k4, k5, k6 = jax.random.split(key, 6)

    def lin(kw, kb, fan_in, fan_out):
        bound = 1.0 / np.sqrt(fan_in)
        w = jax.random.uniform(kw, (fan_in, fan_out), jnp.float32, -bound, bound)
        b = jax.random.uniform(kb, (1, fan_out), jnp.float32, -bound, bound)
        return w, b

    w1, b1 = lin(k1, k2, genome_size, h1)
    w2, b2 = lin(k3, k4, h1, h2)
    w3, b3 = lin(k5, k6, h2, 2)
    gamma = jnp.float32(1.0)
    return (w1, b1, w2, b2, w3, b3, gamma)


def _reference_forward(x, params):
    w1, b1, w2, b2, w3, b3, gamma = params
    lrelu = lambda v: jnp.where(v > 0, v, _NEG_SLOPE * v)
    h = lrelu(x @ w1 + b1)
    h = lrelu(h @ w2 + b2)
    return (h @ w3 + b3) * gamma

# TODO(synk): calc_gamma (data-dependent gamma calibration over a dataloader) is a
# host-side training utility, not part of the forward pass, so it is not kernelized.


if __name__ == "__main__":
    key = jax.random.PRNGKey(0)
    k_param, k_x1, k_x2, k_x3, k_p3 = jax.random.split(key, 5)

    # --- 1. small f32 check, single K step (tight tolerance) -----------------
    genome_a = 32
    params_a = init_params(k_param, genome_a)
    x_a = jax.random.normal(k_x1, (8, genome_a), jnp.float32)
    out_a = jax.block_until_ready(
        graphing_model_forward(x_a, params_a, compute_dtype=jnp.float32))
    ref_a = _reference_forward(x_a, params_a)
    np.testing.assert_allclose(np.asarray(out_a), np.asarray(ref_a),
                               rtol=1e-5, atol=1e-5)

    # --- 2. bf16 compute, ragged batch & genome (padding paths) --------------
    genome_b = 64
    params_b = init_params(k_param, genome_b)
    x_b = jax.random.normal(k_x2, (200, genome_b), jnp.float32)
    out_b = jax.block_until_ready(
        graphing_model_forward(x_b, params_b, compute_dtype=jnp.bfloat16))
    ref_b = _reference_forward(x_b, params_b)
    np.testing.assert_allclose(np.asarray(out_b), np.asarray(ref_b),
                               rtol=2e-2, atol=2e-2)

    # --- 3. large genome -> K-tiled accumulator path (f32 compute) -----------
    genome_c = 2100                       # pads to 2560 = 5 x 512 K steps
    params_c = init_params(k_p3, genome_c)
    x_c = jax.random.normal(k_x3, (256, genome_c), jnp.float32)
    out_c = jax.block_until_ready(
        graphing_model_forward(x_c, params_c, compute_dtype=jnp.float32))
    ref_c = _reference_forward(x_c, params_c)
    np.testing.assert_allclose(np.asarray(out_c), np.asarray(ref_c),
                               rtol=1e-2, atol=1e-2)

    print("KERNEL_OK")
</pallas_src>

<mosaic_0001>
module attributes {stable_mosaic.version = 11 : i64} {
  func.func @_mlp_kernel(%arg0: i32, %arg1: i32, %arg2: memref<1x1xf32, #tpu.memory_space<smem>>, %arg3: memref<128x128xf32, #tpu.memory_space<vmem>>, %arg4: memref<128x256xf32, #tpu.memory_space<vmem>>, %arg5: memref<1x256xf32, #tpu.memory_space<vmem>>, %arg6: memref<256x128xf32, #tpu.memory_space<vmem>>, %arg7: memref<1x128xf32, #tpu.memory_space<vmem>>, %arg8: memref<128x128xf32, #tpu.memory_space<vmem>>, %arg9: memref<1x128xf32, #tpu.memory_space<vmem>>, %arg10: memref<128x128xf32, #tpu.memory_space<vmem>>, %arg11: memref<128x256xf32, #tpu.memory_space<vmem>>) attributes {dimension_semantics = [#tpu.dimension_semantics<parallel>, #tpu.dimension_semantics<arbitrary>], iteration_bounds = array<i64: 1, 1>, scalar_prefetch = 0 : i64, scratch_operands = 1 : i64, tpu.core_type = #tpu.core_type<tc>, window_params = [{transform_indices = @transform_0, window_bounds = array<i64: 1, 1>}, {transform_indices = @transform_1, window_bounds = array<i64: 128, 128>}, {transform_indices = @transform_2, window_bounds = array<i64: 128, 256>}, {pipeline_mode = #tpu.pipeline_mode<synchronous>, transform_indices = @transform_3, window_bounds = array<i64: 1, 256>}, {pipeline_mode = #tpu.pipeline_mode<synchronous>, transform_indices = @transform_4, window_bounds = array<i64: 256, 128>}, {pipeline_mode = #tpu.pipeline_mode<synchronous>, transform_indices = @transform_5, window_bounds = array<i64: 1, 128>}, {pipeline_mode = #tpu.pipeline_mode<synchronous>, transform_indices = @transform_6, window_bounds = array<i64: 128, 128>}, {pipeline_mode = #tpu.pipeline_mode<synchronous>, transform_indices = @transform_7, window_bounds = array<i64: 1, 128>}, {transform_indices = @transform_8, window_bounds = array<i64: 128, 128>}]} {
    %c0_i32 = arith.constant 0 : i32
    %0 = arith.cmpi eq, %arg1, %c0_i32 : i32
    %1 = arith.extui %0 : i1 to i32
    %c0_i32_0 = arith.constant 0 : i32
    %2 = arith.cmpi ne, %1, %c0_i32_0 : i32
    scf.if %2 {
      %cst_10 = arith.constant 0.000000e+00 : f32
      %12 = vector.broadcast %cst_10 : f32 to vector<128x256xf32>
      %c0_11 = arith.constant 0 : index
      %c0_12 = arith.constant 0 : index
      %13 = vector.load %arg11[%c0_11, %c0_12] : memref<128x256xf32, #tpu.memory_space<vmem>>, vector<128x256xf32>
      tpu.vector_store %arg11[%c0_11, %c0_12], %12 {strides = array<i32>} : memref<128x256xf32, #tpu.memory_space<vmem>>, vector<128x256xf32>,
    } else {
    }
    %c0 = arith.constant 0 : index
    %c0_1 = arith.constant 0 : index
    %3 = vector.load %arg11[%c0, %c0_1] : memref<128x256xf32, #tpu.memory_space<vmem>>, vector<128x256xf32>
    %c0_2 = arith.constant 0 : index
    %c0_3 = arith.constant 0 : index
    %4 = vector.load %arg3[%c0_2, %c0_3] : memref<128x128xf32, #tpu.memory_space<vmem>>, vector<128x128xf32>
    %c0_4 = arith.constant 0 : index
    %c0_5 = arith.constant 0 : index
    %5 = vector.load %arg4[%c0_4, %c0_5] : memref<128x256xf32, #tpu.memory_space<vmem>>, vector<128x256xf32>
    %cst = arith.constant dense<0.000000e+00> : vector<128x256xf32>
    %6 = tpu.matmul %4, %5, %cst {dimension_numbers = #tpu.dot_dimension_numbers<[1], [0], [0], [1], [0, 0, 1, 1], [], []>} : vector<128x128xf32>, vector<128x256xf32>, vector<128x256xf32> -> vector<128x256xf32>
    %7 = arith.addf %3, %6 : vector<128x256xf32>
    %c0_6 = arith.constant 0 : index
    %c0_7 = arith.constant 0 : index
    %8 = vector.load %arg11[%c0_6, %c0_7] : memref<128x256xf32, #tpu.memory_space<vmem>>, vector<128x256xf32>
    tpu.vector_store %arg11[%c0_6, %c0_7], %7 {strides = array<i32>} : memref<128x256xf32, #tpu.memory_space<vmem>>, vector<128x256xf32>,
    %c0_i32_8 = arith.constant 0 : i32
    %9 = arith.cmpi eq, %arg1, %c0_i32_8 : i32
    %10 = arith.extui %9 : i1 to i32
    %c0_i32_9 = arith.constant 0 : i32
    %11 = arith.cmpi ne, %10, %c0_i32_9 : i32
    scf.if %11 {
      %c0_10 = arith.constant 0 : index
      %c0_11 = arith.constant 0 : index
      %12 = vector.load %arg11[%c0_10, %c0_11] : memref<128x256xf32, #tpu.memory_space<vmem>>, vector<128x256xf32>
      %c0_12 = arith.constant 0 : index
      %c0_13 = arith.constant 0 : index
      %13 = vector.load %arg5[%c0_12, %c0_13] : memref<1x256xf32, #tpu.memory_space<vmem>>, vector<1x256xf32>
      %14 = vector.broadcast %13 : vector<1x256xf32> to vector<128x256xf32>
      %15 = arith.addf %12, %14 : vector<128x256xf32>
      %cst_14 = arith.constant 0.00999999977 : f32
      %16 = vector.broadcast %cst_14 : f32 to vector<128x256xf32>
      %17 = arith.mulf %16, %15 : vector<128x256xf32>
      %18 = arith.maximumf %15, %17 : vector<128x256xf32>
      %c0_15 = arith.constant 0 : index
      %c0_16 = arith.constant 0 : index
      %19 = vector.load %arg6[%c0_15, %c0_16] : memref<256x128xf32, #tpu.memory_space<vmem>>, vector<256x128xf32>
      %cst_17 = arith.constant dense<0.000000e+00> : vector<128x128xf32>
      %20 = tpu.matmul %18, %19, %cst_17 {dimension_numbers = #tpu.dot_dimension_numbers<[1], [0], [0], [1], [0, 0, 1, 1], [], []>} : vector<128x256xf32>, vector<256x128xf32>, vector<128x128xf32> -> vector<128x128xf32>
      %c0_18 = arith.constant 0 : index
      %c0_19 = arith.constant 0 : index
      %21 = vector.load %arg7[%c0_18, %c0_19] : memref<1x128xf32, #tpu.memory_space<vmem>>, vector<1x128xf32>
      %22 = vector.broadcast %21 : vector<1x128xf32> to vector<128x128xf32>
      %23 = arith.addf %20, %22 : vector<128x128xf32>
      %cst_20 = arith.constant 0.00999999977 : f32
      %24 = vector.broadcast %cst_20 : f32 to vector<128x128xf32>
      %25 = arith.mulf %24, %23 : vector<128x128xf32>
      %26 = arith.maximumf %23, %25 : vector<128x128xf32>
      %c0_21 = arith.constant 0 : index
      %c0_22 = arith.constant 0 : index
      %27 = vector.load %arg8[%c0_21, %c0_22] : memref<128x128xf32, #tpu.memory_space<vmem>>, vector<128x128xf32>
      %cst_23 = arith.constant dense<0.000000e+00> : vector<128x128xf32>
      %28 = tpu.matmul %26, %27, %cst_23 {dimension_numbers = #tpu.dot_dimension_numbers<[1], [0], [0], [1], [0, 0, 1, 1], [], []>} : vector<128x128xf32>, vector<128x128xf32>, vector<128x128xf32> -> vector<128x128xf32>
      %c0_24 = arith.constant 0 : index
      %c0_25 = arith.constant 0 : index
      %29 = vector.load %arg9[%c0_24, %c0_25] : memref<1x128xf32, #tpu.memory_space<vmem>>, vector<1x128xf32>
      %30 = vector.broadcast %29 : vector<1x128xf32> to vector<128x128xf32>
      %31 = arith.addf %28, %30 : vector<128x128xf32>
      %c0_26 = arith.constant 0 : index
      %c0_27 = arith.constant 0 : index
      %32 = memref.load %arg2[%c0_26, %c0_27] : memref<1x1xf32, #tpu.memory_space<smem>>
      %33 = vector.broadcast %32 : f32 to vector<128x128xf32>
      %34 = arith.mulf %31, %33 : vector<128x128xf32>
      %c0_28 = arith.constant 0 : index
      %c0_29 = arith.constant 0 : index
      %35 = vector.load %arg10[%c0_28, %c0_29] : memref<128x128xf32, #tpu.memory_space<vmem>>, vector<128x128xf32>
      tpu.vector_store %arg10[%c0_28, %c0_29], %34 {strides = array<i32>} : memref<128x128xf32, #tpu.memory_space<vmem>>, vector<128x128xf32>,
    } else {
    }
    return
  }
  func.func @transform_0(%arg0: i32, %arg1: i32) -> (i32, i32) {
    %c0_i32 = arith.constant 0 : i32
    %c0_i32_0 = arith.constant 0 : i32
    %c0_i32_1 = arith.constant 0 : i32
    return %c0_i32, %c0_i32_0 : i32, i32
  }
  func.func @transform_1(%arg0: i32, %arg1: i32) -> (i32, i32) {
    %c0_i32 = arith.constant 0 : i32
    return %arg0, %arg1 : i32, i32
  }
  func.func @transform_2(%arg0: i32, %arg1: i32) -> (i32, i32) {
    %c0_i32 = arith.constant 0 : i32
    %c0_i32_0 = arith.constant 0 : i32
    return %arg1, %c0_i32 : i32, i32
  }
  func.func @transform_3(%arg0: i32, %arg1: i32) -> (i32, i32) {
    %c0_i32 = arith.constant 0 : i32
    %c0_i32_0 = arith.constant 0 : i32
    %c0_i32_1 = arith.constant 0 : i32
    return %c0_i32, %c0_i32_0 : i32, i32
  }
  func.func @transform_4(%arg0: i32, %arg1: i32) -> (i32, i32) {
    %c0_i32 = arith.constant 0 : i32
    %c0_i32_0 = arith.constant 0 : i32
    %c0_i32_1 = arith.constant 0 : i32
    return %c0_i32, %c0_i32_0 : i32, i32
  }
  func.func @transform_5(%arg0: i32, %arg1: i32) -> (i32, i32) {
    %c0_i32 = arith.constant 0 : i32
    %c0_i32_0 = arith.constant 0 : i32
    %c0_i32_1 = arith.constant 0 : i32
    return %c0_i32, %c0_i32_0 : i32, i32
  }
  func.func @transform_6(%arg0: i32, %arg1: i32) -> (i32, i32) {
    %c0_i32 = arith.constant 0 : i32
    %c0_i32_0 = arith.constant 0 : i32
    %c0_i32_1 = arith.constant 0 : i32
    return %c0_i32, %c0_i32_0 : i32, i32
  }
  func.func @transform_7(%arg0: i32, %arg1: i32) -> (i32, i32) {
    %c0_i32 = arith.constant 0 : i32
    %c0_i32_0 = arith.constant 0 : i32
    %c0_i32_1 = arith.constant 0 : i32
    return %c0_i32, %c0_i32_0 : i32, i32
  }
  func.func @transform_8(%arg0: i32, %arg1: i32) -> (i32, i32) {
    %c0_i32 = arith.constant 0 : i32
    %c0_i32_0 = arith.constant 0 : i32
    return %arg0, %c0_i32 : i32, i32
  }
}

</mosaic_0001>

<llo_original>
// kernel: tpu_custom_call.1
$region0: #{tpu_custom_call.1}
  #allocation0 [shape = 'u32[]', space=smem, size = 0x4, offset = 0x4, fixed_abs, tag = 'smem constant byte address 0x4 - core index']
  #allocation1 [shape = 'u32[144,128]{1,0:T(1,128)}', space=vmem, size = 0x12000, scoped, tag = 'internal scratch']
  #allocation2 [shape = 'f32[128,256]{1,0:T(8,128)}', space=vmem, size = 0x20000, scoped, tag = 'scratch operand']
  #allocation3 [shape = 'f32[1,1]{1,0:T(1,128)S(6)}', space=smem, size = 0x200, scoped, tag = 'scoped memory for tpu_custom_call.1']
  %s0 = inlined_call_operand.<no memory space> [shape: f32[1,1], index: 0, kind: input, shape index: {}]
  %s1 = inlined_call_operand.hbm [shape: f32[128,128], index: 1, kind: input, shape index: {}]
  %s2 = inlined_call_operand.hbm [shape: f32[128,256], index: 2, kind: input, shape index: {}]
  %s3 = inlined_call_operand.vmem [shape: f32[1,256], index: 3, kind: input, shape index: {}]
  %s4 = inlined_call_operand.hbm [shape: f32[256,128], index: 4, kind: input, shape index: {}]
  %s5 = inlined_call_operand.vmem [shape: f32[1,128], index: 5, kind: input, shape index: {}]
  %s6 = inlined_call_operand.hbm [shape: f32[128,128], index: 6, kind: input, shape index: {}]
  %s7 = inlined_call_operand.vmem [shape: f32[1,128], index: 7, kind: input, shape index: {}]
  %s8 = inlined_call_operand.hbm [shape: f32[128,128], index: 8, kind: output, shape index: {}]
  %s9 = sld [smem:[#allocation0]]
  $region66: #{tpu_custom_call.1} parent=0
    _
  %s11 = ssub.s32 1, %s9
  %s12 = scalar_select 0, %s11, %s9
  %13 = sst [smem:[#allocation3]] %s0
  $region1: #{tpu_custom_call.1} parent=0
    #allocation4 [shape = 'u8[65536]{0}', space=vmem, size = 0x10000, scoped, tag = 'input window, operand 1, single buffered']
    #allocation5 [shape = 's32[1]{0}', space=sflag, size = 0x4, scoped, tag = 'scoped memory for tpu_custom_call.1']
    #allocation6 [shape = 's32[1]{0}', space=sflag, size = 0x4, scoped, tag = 'scoped memory for tpu_custom_call.1']
    #allocation7 [shape = 'u8[131072]{0}', space=vmem, size = 0x20000, scoped, tag = 'input window, operand 2, single buffered']
    #allocation8 [shape = 's32[1]{0}', space=sflag, size = 0x4, scoped, tag = 'scoped memory for tpu_custom_call.1']
    #allocation9 [shape = 'u8[131072]{0}', space=vmem, size = 0x20000, scoped, tag = 'input window, operand 4, single buffered']
    #allocation10 [shape = 'u8[65536]{0}', space=vmem, size = 0x10000, scoped, tag = 'input window, operand 6, single buffered']
    #allocation11 [shape = 's32[1]{0}', space=sflag, size = 0x4, scoped, tag = 'scoped memory for tpu_custom_call.1']
    #allocation12 [shape = 'u8[65536]{0}', space=vmem, size = 0x10000, scoped, tag = 'output window, operand 0, single buffered']
    %14 = vsyncpa [#allocation5], 0
    %15 = vsyncpa [#allocation8], 0
    %16 = vsyncpa [#allocation11], 0
    %17 = vsyncpa [#allocation6], 0
    // Predicated region
    $region2: #{tpu_custom_call.1} parent=1 // pred_check
      _
    $region3: #{tpu_custom_call.1} parent=1 // pred_check_branch
      %19 = sbr.rel (0) target = $region5
    $region4: #{tpu_custom_call.1} parent=1 // pred_region
      _
    $region5: #{tpu_custom_call.1} parent=1 // pred_fallthru
      _
    // Predicated region
    $region6: #{tpu_custom_call.1} parent=1 // pred_check
      _
    $region7: #{tpu_custom_call.1} parent=1 // pred_check_branch
      %21 = sbr.rel (0) target = $region9
    $region8: #{tpu_custom_call.1} parent=1 // pred_region
      %s23 = ssub.s32 2048, 2048
      %24 = vsyncadd [#allocation5], %s23
      %s25 = sshll.u32 [#allocation4], 4
      %s26 = int_to_ptr.vmem [resolvable:$true] %s25
      %31 = dma.hbm_to_vmem [thread:$0]  %s1, 2048, %s26, [#allocation5], 128, 128, 8
    $region9: #{tpu_custom_call.1} parent=1 // pred_fallthru
      _
    // Predicated region
    $region10: #{tpu_custom_call.1} parent=1 // pred_check
      _
    $region11: #{tpu_custom_call.1} parent=1 // pred_check_branch
      %33 = sbr.rel (0) target = $region13
    $region12: #{tpu_custom_call.1} parent=1 // pred_region
      %s35 = ssub.s32 4096, 4096
      %36 = vsyncadd [#allocation8], %s35
      %s37 = sshll.u32 [#allocation7], 4
      %s38 = int_to_ptr.vmem [resolvable:$true] %s37
      %43 = dma.hbm_to_vmem [thread:$0]  %s2, 4096, %s38, [#allocation8], 256, 256, 16
    $region13: #{tpu_custom_call.1} parent=1 // pred_fallthru
      _
    // Predicated region
    $region14: #{tpu_custom_call.1} parent=1 // pred_check
      _
    $region15: #{tpu_custom_call.1} parent=1 // pred_check_branch
      %45 = sbr.rel (0) target = $region17
    $region16: #{tpu_custom_call.1} parent=1 // pred_region
      _
    $region17: #{tpu_custom_call.1} parent=1 // pred_fallthru
      _
    // Predicated region
    $region18: #{tpu_custom_call.1} parent=1 // pred_check
      _
    $region19: #{tpu_custom_call.1} parent=1 // pred_check_branch
      %47 = sbr.rel (0) target = $region21
    $region20: #{tpu_custom_call.1} parent=1 // pred_region
      %s49 = ssub.s32 4096, 4096
      %50 = vsyncadd [#allocation8], %s49
      %s51 = sshll.u32 [#allocation9], 4
      %s52 = int_to_ptr.vmem [resolvable:$true] %s51
      %57 = dma.hbm_to_vmem [thread:$0]  %s4, 4096, %s52, [#allocation8], 128, 128, 8
    $region21: #{tpu_custom_call.1} parent=1 // pred_fallthru
      _
    // Predicated region
    $region22: #{tpu_custom_call.1} parent=1 // pred_check
      _
    $region23: #{tpu_custom_call.1} parent=1 // pred_check_branch
      %59 = sbr.rel (0) target = $region25
    $region24: #{tpu_custom_call.1} parent=1 // pred_region
      _
    $region25: #{tpu_custom_call.1} parent=1 // pred_fallthru
      _
    // Predicated region
    $region26: #{tpu_custom_call.1} parent=1 // pred_check
      _
    $region27: #{tpu_custom_call.1} parent=1 // pred_check_branch
      %61 = sbr.rel (0) target = $region29
    $region28: #{tpu_custom_call.1} parent=1 // pred_region
      %s63 = ssub.s32 2048, 2048
      %64 = vsyncadd [#allocation11], %s63
      %s65 = sshll.u32 [#allocation10], 4
      %s66 = int_to_ptr.vmem [resolvable:$true] %s65
      %71 = dma.hbm_to_vmem [thread:$0]  %s6, 2048, %s66, [#allocation11], 128, 128, 8
    $region29: #{tpu_custom_call.1} parent=1 // pred_fallthru
      _
    // Predicated region
    $region30: #{tpu_custom_call.1} parent=1 // pred_check
      _
    $region31: #{tpu_custom_call.1} parent=1 // pred_check_branch
      %73 = sbr.rel (0) target = $region33
    $region32: #{tpu_custom_call.1} parent=1 // pred_region
      _
    $region33: #{tpu_custom_call.1} parent=1 // pred_fallthru
      _
    // Predicated region
    $region34: #{tpu_custom_call.1} parent=1 // pred_check
      _
    $region35: #{tpu_custom_call.1} parent=1 // pred_check_branch
      %75 = sbr.rel (0) target = $region37
    $region36: #{tpu_custom_call.1} parent=1 // pred_region
      %76 = dma.done [#allocation5], 2048
    $region37: #{tpu_custom_call.1} parent=1 // pred_fallthru
      _
    // Predicated region
    $region38: #{tpu_custom_call.1} parent=1 // pred_check
      _
    $region39: #{tpu_custom_call.1} parent=1 // pred_check_branch
      %78 = sbr.rel (0) target = $region41
    $region40: #{tpu_custom_call.1} parent=1 // pred_region
      %79 = dma.done [#allocation8], 4096
    $region41: #{tpu_custom_call.1} parent=1 // pred_fallthru
      _
    // Predicated region
    $region42: #{tpu_custom_call.1} parent=1 // pred_check
      _
    $region43: #{tpu_custom_call.1} parent=1 // pred_check_branch
      %81 = sbr.rel (0) target = $region45
    $region44: #{tpu_custom_call.1} parent=1 // pred_region
      %82 = dma.done [#allocation8], 4096
    $region45: #{tpu_custom_call.1} parent=1 // pred_fallthru
      _
    // Predicated region
    $region46: #{tpu_custom_call.1} parent=1 // pred_check
      _
    $region47: #{tpu_custom_call.1} parent=1 // pred_check_branch
      %84 = sbr.rel (0) target = $region49
    $region48: #{tpu_custom_call.1} parent=1 // pred_region
      %85 = dma.done [#allocation11], 2048
    $region49: #{tpu_custom_call.1} parent=1 // pred_fallthru
      _
    %p86 = scmp.eq.s32.totalorder 0, 0
    // Predicated region
    $region50: #{tpu_custom_call.1} parent=1 // pred_check
      %p87 = pneg %p86
    $region51: #{tpu_custom_call.1} parent=1 // pred_check_branch
      %89 = sbr.rel (%p87) target = $region53
    $region52: #{tpu_custom_call.1} parent=1 // pred_region
      %90 = vst [vmem:[#allocation2] sm:$0xff] 0.0
      %91 = vst [vmem:[#allocation2 + $0x8] sm:$0xff] 0.0
      %92 = vst [vmem:[#allocation2 + $0x10] sm:$0xff] 0.0
      %93 = vst [vmem:[#allocation2 + $0x18] sm:$0xff] 0.0
      %94 = vst [vmem:[#allocation2 + $0x20] sm:$0xff] 0.0
      %95 = vst [vmem:[#allocation2 + $0x28] sm:$0xff] 0.0
      %96 = vst [vmem:[#allocation2 + $0x30] sm:$0xff] 0.0
      %97 = vst [vmem:[#allocation2 + $0x38] sm:$0xff] 0.0
      %98 = vst [vmem:[#allocation2 + $0x40] sm:$0xff] 0.0
      %99 = vst [vmem:[#allocation2 + $0x48] sm:$0xff] 0.0
      %100 = vst [vmem:[#allocation2 + $0x50] sm:$0xff] 0.0
      %101 = vst [vmem:[#allocation2 + $0x58] sm:$0xff] 0.0
      %102 = vst [vmem:[#allocation2 + $0x60] sm:$0xff] 0.0
      %103 = vst [vmem:[#allocation2 + $0x68] sm:$0xff] 0.0
      %104 = vst [vmem:[#allocation2 + $0x70] sm:$0xff] 0.0
      %105 = vst [vmem:[#allocation2 + $0x78] sm:$0xff] 0.0
      %106 = vst [vmem:[#allocation2 + $0x80] sm:$0xff] 0.0
      %107 = vst [vmem:[#allocation2 + $0x88] sm:$0xff] 0.0
      %108 = vst [vmem:[#allocation2 + $0x90] sm:$0xff] 0.0
      %109 = vst [vmem:[#allocation2 + $0x98] sm:$0xff] 0.0
      %110 = vst [vmem:[#allocation2 + $0xa0] sm:$0xff] 0.0
      %111 = vst [vmem:[#allocation2 + $0xa8] sm:$0xff] 0.0
      %112 = vst [vmem:[#allocation2 + $0xb0] sm:$0xff] 0.0
      %113 = vst [vmem:[#allocation2 + $0xb8] sm:$0xff] 0.0
      %114 = vst [vmem:[#allocation2 + $0xc0] sm:$0xff] 0.0
      %115 = vst [vmem:[#allocation2 + $0xc8] sm:$0xff] 0.0
      %116 = vst [vmem:[#allocation2 + $0xd0] sm:$0xff] 0.0
      %117 = vst [vmem:[#allocation2 + $0xd8] sm:$0xff] 0.0
      %118 = vst [vmem:[#allocation2 + $0xe0] sm:$0xff] 0.0
      %119 = vst [vmem:[#allocation2 + $0xe8] sm:$0xff] 0.0
      %120 = vst [vmem:[#allocation2 + $0xf0] sm:$0xff] 0.0
      %121 = vst [vmem:[#allocation2 + $0xf8] sm:$0xff] 0.0
    $region53: #{tpu_custom_call.1} parent=1 // pred_fallthru
      _
    %v122 = vld [vmem:[#allocation2] sm:$0xff]
    %v123 = vld [vmem:[#allocation2 + $0x8] sm:$0xff]
    %v124 = vld [vmem:[#allocation2 + $0x10] sm:$0xff]
    %v125 = vld [vmem:[#allocation2 + $0x18] sm:$0xff]
    %v126 = vld [vmem:[#allocation2 + $0x20] sm:$0xff]
    %v127 = vld [vmem:[#allocation2 + $0x28] sm:$0xff]
    %v128 = vld [vmem:[#allocation2 + $0x30] sm:$0xff]
    %v129 = vld [vmem:[#allocation2 + $0x38] sm:$0xff]
    %v130 = vld [vmem:[#allocation2 + $0x40] sm:$0xff]
    %v131 = vld [vmem:[#allocation2 + $0x48] sm:$0xff]
    %v132 = vld [vmem:[#allocation2 + $0x50] sm:$0xff]
    %v133 = vld [vmem:[#allocation2 + $0x58] sm:$0xff]
    %v134 = vld [vmem:[#allocation2 + $0x60] sm:$0xff]
    %v135 = vld [vmem:[#allocation2 + $0x68] sm:$0xff]
    %v136 = vld [vmem:[#allocation2 + $0x70] sm:$0xff]
    %v137 = vld [vmem:[#allocation2 + $0x78] sm:$0xff]
    %v138 = vld [vmem:[#allocation2 + $0x80] sm:$0xff]
    %v139 = vld [vmem:[#allocation2 + $0x88] sm:$0xff]
    %v140 = vld [vmem:[#allocation2 + $0x90] sm:$0xff]
    %v141 = vld [vmem:[#allocation2 + $0x98] sm:$0xff]
    %v142 = vld [vmem:[#allocation2 + $0xa0] sm:$0xff]
    %v143 = vld [vmem:[#allocation2 + $0xa8] sm:$0xff]
    %v144 = vld [vmem:[#allocation2 + $0xb0] sm:$0xff]
    %v145 = vld [vmem:[#allocation2 + $0xb8] sm:$0xff]
    %v146 = vld [vmem:[#allocation2 + $0xc0] sm:$0xff]
    %v147 = vld [vmem:[#allocation2 + $0xc8] sm:$0xff]
    %v148 = vld [vmem:[#allocation2 + $0xd0] sm:$0xff]
    %v149 = vld [vmem:[#allocation2 + $0xd8] sm:$0xff]
    %v150 = vld [vmem:[#allocation2 + $0xe0] sm:$0xff]
    %v151 = vld [vmem:[#allocation2 + $0xe8] sm:$0xff]
    %v152 = vld [vmem:[#allocation2 + $0xf0] sm:$0xff]
    %v153 = vld [vmem:[#allocation2 + $0xf8] sm:$0xff]
    %v154 = vld [vmem:[#allocation4] sm:$0xff]
    %v155 = vld [vmem:[#allocation4 + $0x8] sm:$0xff]
    %v156 = vld [vmem:[#allocation4 + $0x10] sm:$0xff]
    %v157 = vld [vmem:[#allocation4 + $0x18] sm:$0xff]
    %v158 = vld [vmem:[#allocation4 + $0x20] sm:$0xff]
    %v159 = vld [vmem:[#allocation4 + $0x28] sm:$0xff]
    %v160 = vld [vmem:[#allocation4 + $0x30] sm:$0xff]
    %v161 = vld [vmem:[#allocation4 + $0x38] sm:$0xff]
    %v162 = vld [vmem:[#allocation4 + $0x40] sm:$0xff]
    %v163 = vld [vmem:[#allocation4 + $0x48] sm:$0xff]
    %v164 = vld [vmem:[#allocation4 + $0x50] sm:$0xff]
    %v165 = vld [vmem:[#allocation4 + $0x58] sm:$0xff]
    %v166 = vld [vmem:[#allocation4 + $0x60] sm:$0xff]
    %v167 = vld [vmem:[#allocation4 + $0x68] sm:$0xff]
    %v168 = vld [vmem:[#allocation4 + $0x70] sm:$0xff]
    %v169 = vld [vmem:[#allocation4 + $0x78] sm:$0xff]
    %v170 = vld [vmem:[#allocation7] sm:$0xff]
    %v171 = vld [vmem:[#allocation7 + $0x8] sm:$0xff]
    %v172 = vld [vmem:[#allocation7 + $0x10] sm:$0xff]
    %v173 = vld [vmem:[#allocation7 + $0x18] sm:$0xff]
    %v174 = vld [vmem:[#allocation7 + $0x20] sm:$0xff]
    %v175 = vld [vmem:[#allocation7 + $0x28] sm:$0xff]
    %v176 = vld [vmem:[#allocation7 + $0x30] sm:$0xff]
    %v177 = vld [vmem:[#allocation7 + $0x38] sm:$0xff]
    %v178 = vld [vmem:[#allocation7 + $0x40] sm:$0xff]
    %v179 = vld [vmem:[#allocation7 + $0x48] sm:$0xff]
    %v180 = vld [vmem:[#allocation7 + $0x50] sm:$0xff]
    %v181 = vld [vmem:[#allocation7 + $0x58] sm:$0xff]
    %v182 = vld [vmem:[#allocation7 + $0x60] sm:$0xff]
    %v183 = vld [vmem:[#allocation7 + $0x68] sm:$0xff]
    %v184 = vld [vmem:[#allocation7 + $0x70] sm:$0xff]
    %v185 = vld [vmem:[#allocation7 + $0x78] sm:$0xff]
    %v186 = vld [vmem:[#allocation7 + $0x80] sm:$0xff]
    %v187 = vld [vmem:[#allocation7 + $0x88] sm:$0xff]
    %v188 = vld [vmem:[#allocation7 + $0x90] sm:$0xff]
    %v189 = vld [vmem:[#allocation7 + $0x98] sm:$0xff]
    %v190 = vld [vmem:[#allocation7 + $0xa0] sm:$0xff]
    %v191 = vld [vmem:[#allocation7 + $0xa8] sm:$0xff]
    %v192 = vld [vmem:[#allocation7 + $0xb0] sm:$0xff]
    %v193 = vld [vmem:[#allocation7 + $0xb8] sm:$0xff]
    %v194 = vld [vmem:[#allocation7 + $0xc0] sm:$0xff]
    %v195 = vld [vmem:[#allocation7 + $0xc8] sm:$0xff]
    %v196 = vld [vmem:[#allocation7 + $0xd0] sm:$0xff]
    %v197 = vld [vmem:[#allocation7 + $0xd8] sm:$0xff]
    %v198 = vld [vmem:[#allocation7 + $0xe0] sm:$0xff]
    %v199 = vld [vmem:[#allocation7 + $0xe8] sm:$0xff]
    %v200 = vld [vmem:[#allocation7 + $0xf0] sm:$0xff]
    %v201 = vld [vmem:[#allocation7 + $0xf8] sm:$0xff]
    %202 = vmatprep.subr.mxu0 %v201
    %203 = vmatpush1.msra.mxu0 %v200
    %204 = vmatprep.subr.mxu0 %v199
    %205 = vmatpush1.msra.mxu0 %v198
    %206 = vmatprep.subr.mxu0 %v197
    %207 = vmatpush1.msra.mxu0 %v196
    %208 = vmatprep.subr.mxu0 %v195
    %209 = vmatpush1.msra.mxu0 %v194
    %210 = vmatprep.subr.mxu0 %v193
    %211 = vmatpush1.msra.mxu0 %v192
    %212 = vmatprep.subr.mxu0 %v191
    %213 = vmatpush1.msra.mxu0 %v190
    %214 = vmatprep.subr.mxu0 %v189
    %215 = vmatpush1.msra.mxu0 %v188
    %216 = vmatprep.subr.mxu0 %v187
    %217 = vmatpush1.msra.mxu0 %v186
    %218 = vmatprep.subr.mxu0 %v185
    %219 = vmatpush1.msra.mxu0 %v184
    %220 = vmatprep.subr.mxu0 %v183
    %221 = vmatpush1.msra.mxu0 %v182
    %222 = vmatprep.subr.mxu0 %v181
    %223 = vmatpush1.msra.mxu0 %v180
    %224 = vmatprep.subr.mxu0 %v179
    %225 = vmatpush1.msra.mxu0 %v178
    %226 = vmatprep.subr.mxu0 %v177
    %227 = vmatpush1.msra.mxu0 %v176
    %228 = vmatprep.subr.mxu0 %v175
    %229 = vmatpush1.msra.mxu0 %v174
    %230 = vmatprep.subr.mxu0 %v173
    %231 = vmatpush1.msra.mxu0 %v172
    %232 = vmatprep.subr.mxu0 %v171
    %233 = vmatpush1.msra.mxu0 %v170
    %234 = vmatprep.subr.mxu0 0.0
    %235 = vmatpush2.msra.mxu0 0.0
    %236 = vmatprep.subr.mxu0 0.0
    %237 = vmatpush2.msra.mxu0 0.0
    %238 = vmatprep.subr.mxu0 0.0
    %239 = vmatpush2.msra.mxu0 0.0
    %240 = vmatprep.subr.mxu0 0.0
    %241 = vmatpush2.msra.mxu0 0.0
    %242 = vmatprep.subr.mxu0 0.0
    %243 = vmatpush2.msra.mxu0 0.0
    %244 = vmatprep.subr.mxu0 0.0
    %245 = vmatpush2.msra.mxu0 0.0
    %246 = vmatprep.subr.mxu0 0.0
    %247 = vmatpush2.msra.mxu0 0.0
    %248 = vmatprep.subr.mxu0 0.0
    %249 = vmatpush2.msra.mxu0 0.0
    %250 = vmatprep.subr.mxu0 0.0
    %251 = vmatpush2.msra.mxu0 0.0
    %252 = vmatprep.subr.mxu0 0.0
    %253 = vmatpush2.msra.mxu0 0.0
    %254 = vmatprep.subr.mxu0 0.0
    %255 = vmatpush2.msra.mxu0 0.0
    %256 = vmatprep.subr.mxu0 0.0
    %257 = vmatpush2.msra.mxu0 0.0
    %258 = vmatprep.subr.mxu0 0.0
    %259 = vmatpush2.msra.mxu0 0.0
    %260 = vmatprep.subr.mxu0 0.0
    %261 = vmatpush2.msra.mxu0 0.0
    %262 = vmatprep.subr.mxu0 0.0
    %263 = vmatpush2.msra.mxu0 0.0
    %264 = vmatprep.subr.mxu0 0.0
    %265 = vmatpush2.msra.mxu0 0.0
    %266 = vmatprep.mubr.f32.mxu0 0.0
    %267 = vmatmul.mubr.f32.gmra.mxu0 %v154
    %v268 = vpop.f32.mrf.mxu0
    %v269 = vadd.f32 0.0, %v268
    %v270 = vpop.f32.mrf.mxu0
    %v271 = vadd.f32 0.0, %v270
    %272 = vmatprep.mubr.f32.mxu0 0.0
    %273 = vmatmul.mubr.f32.gmra.mxu0 %v155
    %v274 = vpop.f32.mrf.mxu0
    %v275 = vadd.f32 0.0, %v274
    %v276 = vpop.f32.mrf.mxu0
    %v277 = vadd.f32 0.0, %v276
    %278 = vmatprep.mubr.f32.mxu0 0.0
    %279 = vmatmul.mubr.f32.gmra.mxu0 %v156
    %v280 = vpop.f32.mrf.mxu0
    %v281 = vadd.f32 0.0, %v280
    %v282 = vpop.f32.mrf.mxu0
    %v283 = vadd.f32 0.0, %v282
    %284 = vmatprep.mubr.f32.mxu0 0.0
    %285 = vmatmul.mubr.f32.gmra.mxu0 %v157
    %v286 = vpop.f32.mrf.mxu0
    %v287 = vadd.f32 0.0, %v286
    %v288 = vpop.f32.mrf.mxu0
    %v289 = vadd.f32 0.0, %v288
    %290 = vmatprep.mubr.f32.mxu0 0.0
    %291 = vmatmul.mubr.f32.gmra.mxu0 %v158
    %v292 = vpop.f32.mrf.mxu0
    %v293 = vadd.f32 0.0, %v292
    %v294 = vpop.f32.mrf.mxu0
    %v295 = vadd.f32 0.0, %v294
    %296 = vmatprep.mubr.f32.mxu0 0.0
    %297 = vmatmul.mubr.f32.gmra.mxu0 %v159
    %v298 = vpop.f32.mrf.mxu0
    %v299 = vadd.f32 0.0, %v298
    %v300 = vpop.f32.mrf.mxu0
    %v301 = vadd.f32 0.0, %v300
    %302 = vmatprep.mubr.f32.mxu0 0.0
    %303 = vmatmul.mubr.f32.gmra.mxu0 %v160
    %v304 = vpop.f32.mrf.mxu0
    %v305 = vadd.f32 0.0, %v304
    %v306 = vpop.f32.mrf.mxu0
    %v307 = vadd.f32 0.0, %v306
    %308 = vmatprep.mubr.f32.mxu0 0.0
    %309 = vmatmul.mubr.f32.gmra.mxu0 %v161
    %v310 = vpop.f32.mrf.mxu0
    %v311 = vadd.f32 0.0, %v310
    %v312 = vpop.f32.mrf.mxu0
    %v313 = vadd.f32 0.0, %v312
    %314 = vmatprep.mubr.f32.mxu0 0.0
    %315 = vmatmul.mubr.f32.gmra.mxu0 %v162
    %v316 = vpop.f32.mrf.mxu0
    %v317 = vadd.f32 0.0, %v316
    %v318 = vpop.f32.mrf.mxu0
    %v319 = vadd.f32 0.0, %v318
    %320 = vmatprep.mubr.f32.mxu0 0.0
    %321 = vmatmul.mubr.f32.gmra.mxu0 %v163
    %v322 = vpop.f32.mrf.mxu0
    %v323 = vadd.f32 0.0, %v322
    %v324 = vpop.f32.mrf.mxu0
    %v325 = vadd.f32 0.0, %v324
    %326 = vmatprep.mubr.f32.mxu0 0.0
    %327 = vmatmul.mubr.f32.gmra.mxu0 %v164
    %v328 = vpop.f32.mrf.mxu0
    %v329 = vadd.f32 0.0, %v328
    %v330 = vpop.f32.mrf.mxu0
    %v331 = vadd.f32 0.0, %v330
    %332 = vmatprep.mubr.f32.mxu0 0.0
    %333 = vmatmul.mubr.f32.gmra.mxu0 %v165
    %v334 = vpop.f32.mrf.mxu0
    %v335 = vadd.f32 0.0, %v334
    %v336 = vpop.f32.mrf.mxu0
    %v337 = vadd.f32 0.0, %v336
    %338 = vmatprep.mubr.f32.mxu0 0.0
    %339 = vmatmul.mubr.f32.gmra.mxu0 %v166
    %v340 = vpop.f32.mrf.mxu0
    %v341 = vadd.f32 0.0, %v340
    %v342 = vpop.f32.mrf.mxu0
    %v343 = vadd.f32 0.0, %v342
    %344 = vmatprep.mubr.f32.mxu0 0.0
    %345 = vmatmul.mubr.f32.gmra.mxu0 %v167
    %v346 = vpop.f32.mrf.mxu0
    %v347 = vadd.f32 0.0, %v346
    %v348 = vpop.f32.mrf.mxu0
    %v349 = vadd.f32 0.0, %v348
    %350 = vmatprep.mubr.f32.mxu0 0.0
    %351 = vmatmul.mubr.f32.gmra.mxu0 %v168
    %v352 = vpop.f32.mrf.mxu0
    %v353 = vadd.f32 0.0, %v352
    %v354 = vpop.f32.mrf.mxu0
    %v355 = vadd.f32 0.0, %v354
    %356 = vmatprep.mubr.f32.mxu0 0.0
    %357 = vmatmul.mubr.f32.gmra.mxu0 %v169
    %v358 = vpop.f32.mrf.mxu0
    %v359 = vadd.f32 0.0, %v358
    %v360 = vpop.f32.mrf.mxu0
    %v361 = vadd.f32 0.0, %v360
    %362 = vdwg.mxu0
    %v363 = vadd.f32 %v122, %v269
    %v364 = vadd.f32 %v123, %v271
    %v365 = vadd.f32 %v124, %v275
    %v366 = vadd.f32 %v125, %v277
    %v367 = vadd.f32 %v126, %v281
    %v368 = vadd.f32 %v127, %v283
    %v369 = vadd.f32 %v128, %v287
    %v370 = vadd.f32 %v129, %v289
    %v371 = vadd.f32 %v130, %v293
    %v372 = vadd.f32 %v131, %v295
    %v373 = vadd.f32 %v132, %v299
    %v374 = vadd.f32 %v133, %v301
    %v375 = vadd.f32 %v134, %v305
    %v376 = vadd.f32 %v135, %v307
    %v377 = vadd.f32 %v136, %v311
    %v378 = vadd.f32 %v137, %v313
    %v379 = vadd.f32 %v138, %v317
    %v380 = vadd.f32 %v139, %v319
    %v381 = vadd.f32 %v140, %v323
    %v382 = vadd.f32 %v141, %v325
    %v383 = vadd.f32 %v142, %v329
    %v384 = vadd.f32 %v143, %v331
    %v385 = vadd.f32 %v144, %v335
    %v386 = vadd.f32 %v145, %v337
    %v387 = vadd.f32 %v146, %v341
    %v388 = vadd.f32 %v147, %v343
    %v389 = vadd.f32 %v148, %v347
    %v390 = vadd.f32 %v149, %v349
    %v391 = vadd.f32 %v150, %v353
    %v392 = vadd.f32 %v151, %v355
    %v393 = vadd.f32 %v152, %v359
    %v394 = vadd.f32 %v153, %v361
    %395 = vst [vmem:[#allocation2] sm:$0xff] %v363
    %396 = vst [vmem:[#allocation2 + $0x8] sm:$0xff] %v364
    %397 = vst [vmem:[#allocation2 + $0x10] sm:$0xff] %v365
    %398 = vst [vmem:[#allocation2 + $0x18] sm:$0xff] %v366
    %399 = vst [vmem:[#allocation2 + $0x20] sm:$0xff] %v367
    %400 = vst [vmem:[#allocation2 + $0x28] sm:$0xff] %v368
    %401 = vst [vmem:[#allocation2 + $0x30] sm:$0xff] %v369
    %402 = vst [vmem:[#allocation2 + $0x38] sm:$0xff] %v370
    %403 = vst [vmem:[#allocation2 + $0x40] sm:$0xff] %v371
    %404 = vst [vmem:[#allocation2 + $0x48] sm:$0xff] %v372
    %405 = vst [vmem:[#allocation2 + $0x50] sm:$0xff] %v373
    %406 = vst [vmem:[#allocation2 + $0x58] sm:$0xff] %v374
    %407 = vst [vmem:[#allocation2 + $0x60] sm:$0xff] %v375
    %408 = vst [vmem:[#allocation2 + $0x68] sm:$0xff] %v376
    %409 = vst [vmem:[#allocation2 + $0x70] sm:$0xff] %v377
    %410 = vst [vmem:[#allocation2 + $0x78] sm:$0xff] %v378
    %411 = vst [vmem:[#allocation2 + $0x80] sm:$0xff] %v379
    %412 = vst [vmem:[#allocation2 + $0x88] sm:$0xff] %v380
    %413 = vst [vmem:[#allocation2 + $0x90] sm:$0xff] %v381
    %414 = vst [vmem:[#allocation2 + $0x98] sm:$0xff] %v382
    %415 = vst [vmem:[#allocation2 + $0xa0] sm:$0xff] %v383
    %416 = vst [vmem:[#allocation2 + $0xa8] sm:$0xff] %v384
    %417 = vst [vmem:[#allocation2 + $0xb0] sm:$0xff] %v385
    %418 = vst [vmem:[#allocation2 + $0xb8] sm:$0xff] %v386
    %419 = vst [vmem:[#allocation2 + $0xc0] sm:$0xff] %v387
    %420 = vst [vmem:[#allocation2 + $0xc8] sm:$0xff] %v388
    %421 = vst [vmem:[#allocation2 + $0xd0] sm:$0xff] %v389
    %422 = vst [vmem:[#allocation2 + $0xd8] sm:$0xff] %v390
    %423 = vst [vmem:[#allocation2 + $0xe0] sm:$0xff] %v391
    %424 = vst [vmem:[#allocation2 + $0xe8] sm:$0xff] %v392
    %425 = vst [vmem:[#allocation2 + $0xf0] sm:$0xff] %v393
    %426 = vst [vmem:[#allocation2 + $0xf8] sm:$0xff] %v394
    // Predicated region
    $region54: #{tpu_custom_call.1} parent=1 // pred_check
      %p427 = pneg %p86
    $region55: #{tpu_custom_call.1} parent=1 // pred_check_branch
      %429 = sbr.rel (%p427) target = $region57
    $region56: #{tpu_custom_call.1} parent=1 // pred_region
      %v430 = vld [vmem:[#allocation2] sm:$0xff]
      %v431 = vld [vmem:[#allocation2 + $0x8] sm:$0xff]
      %v432 = vld [vmem:[#allocation2 + $0x10] sm:$0xff]
      %v433 = vld [vmem:[#allocation2 + $0x18] sm:$0xff]
      %v434 = vld [vmem:[#allocation2 + $0x20] sm:$0xff]
      %v435 = vld [vmem:[#allocation2 + $0x28] sm:$0xff]
      %v436 = vld [vmem:[#allocation2 + $0x30] sm:$0xff]
      %v437 = vld [vmem:[#allocation2 + $0x38] sm:$0xff]
      %v438 = vld [vmem:[#allocation2 + $0x40] sm:$0xff]
      %v439 = vld [vmem:[#allocation2 + $0x48] sm:$0xff]
      %v440 = vld [vmem:[#allocation2 + $0x50] sm:$0xff]
      %v441 = vld [vmem:[#allocation2 + $0x58] sm:$0xff]
      %v442 = vld [vmem:[#allocation2 + $0x60] sm:$0xff]
      %v443 = vld [vmem:[#allocation2 + $0x68] sm:$0xff]
      %v444 = vld [vmem:[#allocation2 + $0x70] sm:$0xff]
      %v445 = vld [vmem:[#allocation2 + $0x78] sm:$0xff]
      %v446 = vld [vmem:[#allocation2 + $0x80] sm:$0xff]
      %v447 = vld [vmem:[#allocation2 + $0x88] sm:$0xff]
      %v448 = vld [vmem:[#allocation2 + $0x90] sm:$0xff]
      %v449 = vld [vmem:[#allocation2 + $0x98] sm:$0xff]
      %v450 = vld [vmem:[#allocation2 + $0xa0] sm:$0xff]
      %v451 = vld [vmem:[#allocation2 + $0xa8] sm:$0xff]
      %v452 = vld [vmem:[#allocation2 + $0xb0] sm:$0xff]
      %v453 = vld [vmem:[#allocation2 + $0xb8] sm:$0xff]
      %v454 = vld [vmem:[#allocation2 + $0xc0] sm:$0xff]
      %v455 = vld [vmem:[#allocation2 + $0xc8] sm:$0xff]
      %v456 = vld [vmem:[#allocation2 + $0xd0] sm:$0xff]
      %v457 = vld [vmem:[#allocation2 + $0xd8] sm:$0xff]
      %v458 = vld [vmem:[#allocation2 + $0xe0] sm:$0xff]
      %v459 = vld [vmem:[#allocation2 + $0xe8] sm:$0xff]
      %v460 = vld [vmem:[#allocation2 + $0xf0] sm:$0xff]
      %v461 = vld [vmem:[#allocation2 + $0xf8] sm:$0xff]
      %v462 = vld [vmem:[%s3] sm:$0x3]
      %v464 = vlaneseq
      %v465 = vshrl.u32 %v464, 7
      %v466 = vsub.s32 0, %v465
      %v467 = vrot.slane %v462, %v466
      %v468 = vlaneseq
      %v469 = vshrl.u32 %v468, 7
      %v470 = vsub.s32 1, %v469
      %v471 = vrot.slane %v462, %v470
      %v474 = vadd.f32 %v430, %v467
      %v475 = vadd.f32 %v431, %v471
      %v476 = vadd.f32 %v432, %v467
      %v477 = vadd.f32 %v433, %v471
      %v478 = vadd.f32 %v434, %v467
      %v479 = vadd.f32 %v435, %v471
      %v480 = vadd.f32 %v436, %v467
      %v481 = vadd.f32 %v437, %v471
      %v482 = vadd.f32 %v438, %v467
      %v483 = vadd.f32 %v439, %v471
      %v484 = vadd.f32 %v440, %v467
      %v485 = vadd.f32 %v441, %v471
      %v486 = vadd.f32 %v442, %v467
      %v487 = vadd.f32 %v443, %v471
      %v488 = vadd.f32 %v444, %v467
      %v489 = vadd.f32 %v445, %v471
      %v490 = vadd.f32 %v446, %v467
      %v491 = vadd.f32 %v447, %v471
      %v492 = vadd.f32 %v448, %v467
      %v493 = vadd.f32 %v449, %v471
      %v494 = vadd.f32 %v450, %v467
      %v495 = vadd.f32 %v451, %v471
      %v496 = vadd.f32 %v452, %v467
      %v497 = vadd.f32 %v453, %v471
      %v498 = vadd.f32 %v454, %v467
      %v499 = vadd.f32 %v455, %v471
      %v500 = vadd.f32 %v456, %v467
      %v501 = vadd.f32 %v457, %v471
      %v502 = vadd.f32 %v458, %v467
      %v503 = vadd.f32 %v459, %v471
      %v504 = vadd.f32 %v460, %v467
      %v505 = vadd.f32 %v461, %v471
      %v506 = vmul.f32 %v474, 0.01
      %v507 = vmul.f32 %v475, 0.01
      %v508 = vmul.f32 %v476, 0.01
      %v509 = vmul.f32 %v477, 0.01
      %v510 = vmul.f32 %v478, 0.01
      %v511 = vmul.f32 %v479, 0.01
      %v512 = vmul.f32 %v480, 0.01
      %v513 = vmul.f32 %v481, 0.01
      %v514 = vmul.f32 %v482, 0.01
      %v515 = vmul.f32 %v483, 0.01
      %v516 = vmul.f32 %v484, 0.01
      %v517 = vmul.f32 %v485, 0.01
      %v518 = vmul.f32 %v486, 0.01
      %v519 = vmul.f32 %v487, 0.01
      %v520 = vmul.f32 %v488, 0.01
      %v521 = vmul.f32 %v489, 0.01
      %v522 = vmul.f32 %v490, 0.01
      %v523 = vmul.f32 %v491, 0.01
      %v524 = vmul.f32 %v492, 0.01
      %v525 = vmul.f32 %v493, 0.01
      %v526 = vmul.f32 %v494, 0.01
      %v527 = vmul.f32 %v495, 0.01
      %v528 = vmul.f32 %v496, 0.01
      %v529 = vmul.f32 %v497, 0.01
      %v530 = vmul.f32 %v498, 0.01
      %v531 = vmul.f32 %v499, 0.01
      %v532 = vmul.f32 %v500, 0.01
      %v533 = vmul.f32 %v501, 0.01
      %v534 = vmul.f32 %v502, 0.01
      %v535 = vmul.f32 %v503, 0.01
      %v536 = vmul.f32 %v504, 0.01
      %v537 = vmul.f32 %v505, 0.01
      %v538 = vmax.f32 %v474, %v506
      %v539 = vmax.f32 %v475, %v507
      %v540 = vmax.f32 %v476, %v508
      %v541 = vmax.f32 %v477, %v509
      %v542 = vmax.f32 %v478, %v510
      %v543 = vmax.f32 %v479, %v511
      %v544 = vmax.f32 %v480, %v512
      %v545 = vmax.f32 %v481, %v513
      %v546 = vmax.f32 %v482, %v514
      %v547 = vmax.f32 %v483, %v515
      %v548 = vmax.f32 %v484, %v516
      %v549 = vmax.f32 %v485, %v517
      %v550 = vmax.f32 %v486, %v518
      %v551 = vmax.f32 %v487, %v519
      %v552 = vmax.f32 %v488, %v520
      %v553 = vmax.f32 %v489, %v521
      %v554 = vmax.f32 %v490, %v522
      %v555 = vmax.f32 %v491, %v523
      %v556 = vmax.f32 %v492, %v524
      %v557 = vmax.f32 %v493, %v525
      %v558 = vmax.f32 %v494, %v526
      %v559 = vmax.f32 %v495, %v527
      %v560 = vmax.f32 %v496, %v528
      %v561 = vmax.f32 %v497, %v529
      %v562 = vmax.f32 %v498, %v530
      %v563 = vmax.f32 %v499, %v531
      %v564 = vmax.f32 %v500, %v532
      %v565 = vmax.f32 %v501, %v533
      %v566 = vmax.f32 %v502, %v534
      %v567 = vmax.f32 %v503, %v535
      %v568 = vmax.f32 %v504, %v536
      %v569 = vmax.f32 %v505, %v537
      %v570 = vld [vmem:[#allocation9] sm:$0xff]
      %v571 = vld [vmem:[#allocation9 + $0x8] sm:$0xff]
      %v572 = vld [vmem:[#allocation9 + $0x10] sm:$0xff]
      %v573 = vld [vmem:[#allocation9 + $0x18] sm:$0xff]
      %v574 = vld [vmem:[#allocation9 + $0x20] sm:$0xff]
      %v575 = vld [vmem:[#allocation9 + $0x28] sm:$0xff]
      %v576 = vld [vmem:[#allocation9 + $0x30] sm:$0xff]
      %v577 = vld [vmem:[#allocation9 + $0x38] sm:$0xff]
      %v578 = vld [vmem:[#allocation9 + $0x40] sm:$0xff]
      %v579 = vld [vmem:[#allocation9 + $0x48] sm:$0xff]
      %v580 = vld [vmem:[#allocation9 + $0x50] sm:$0xff]
      %v581 = vld [vmem:[#allocation9 + $0x58] sm:$0xff]
      %v582 = vld [vmem:[#allocation9 + $0x60] sm:$0xff]
      %v583 = vld [vmem:[#allocation9 + $0x68] sm:$0xff]
      %v584 = vld [vmem:[#allocation9 + $0x70] sm:$0xff]
      %v585 = vld [vmem:[#allocation9 + $0x78] sm:$0xff]
      %v586 = vld [vmem:[#allocation9 + $0x80] sm:$0xff]
      %v587 = vld [vmem:[#allocation9 + $0x88] sm:$0xff]
      %v588 = vld [vmem:[#allocation9 + $0x90] sm:$0xff]
      %v589 = vld [vmem:[#allocation9 + $0x98] sm:$0xff]
      %v590 = vld [vmem:[#allocation9 + $0xa0] sm:$0xff]
      %v591 = vld [vmem:[#allocation9 + $0xa8] sm:$0xff]
      %v592 = vld [vmem:[#allocation9 + $0xb0] sm:$0xff]
      %v593 = vld [vmem:[#allocation9 + $0xb8] sm:$0xff]
      %v594 = vld [vmem:[#allocation9 + $0xc0] sm:$0xff]
      %v595 = vld [vmem:[#allocation9 + $0xc8] sm:$0xff]
      %v596 = vld [vmem:[#allocation9 + $0xd0] sm:$0xff]
      %v597 = vld [vmem:[#allocation9 + $0xd8] sm:$0xff]
      %v598 = vld [vmem:[#allocation9 + $0xe0] sm:$0xff]
      %v599 = vld [vmem:[#allocation9 + $0xe8] sm:$0xff]
      %v600 = vld [vmem:[#allocation9 + $0xf0] sm:$0xff]
      %v601 = vld [vmem:[#allocation9 + $0xf8] sm:$0xff]
      %v602 = vld [vmem:[%s5] sm:$0x1]
      %v604 = vlaneseq
      %v605 = vshrl.u32 %v604, 7
      %v606 = vsub.s32 0, %v605
      %v607 = vrot.slane %v602, %v606
      %609 = vmatprep.subr.mxu0 0.0
      %610 = vmatpush1.msra.mxu0 %v585
      %611 = vmatprep.subr.mxu0 0.0
      %612 = vmatpush1.msra.mxu0 %v584
      %613 = vmatprep.subr.mxu0 0.0
      %614 = vmatpush1.msra.mxu0 %v583
      %615 = vmatprep.subr.mxu0 0.0
      %616 = vmatpush1.msra.mxu0 %v582
      %617 = vmatprep.subr.mxu0 0.0
      %618 = vmatpush1.msra.mxu0 %v581
      %619 = vmatprep.subr.mxu0 0.0
      %620 = vmatpush1.msra.mxu0 %v580
      %621 = vmatprep.subr.mxu0 0.0
      %622 = vmatpush1.msra.mxu0 %v579
      %623 = vmatprep.subr.mxu0 0.0
      %624 = vmatpush1.msra.mxu0 %v578
      %625 = vmatprep.subr.mxu0 0.0
      %626 = vmatpush1.msra.mxu0 %v577
      %627 = vmatprep.subr.mxu0 0.0
      %628 = vmatpush1.msra.mxu0 %v576
      %629 = vmatprep.subr.mxu0 0.0
      %630 = vmatpush1.msra.mxu0 %v575
      %631 = vmatprep.subr.mxu0 0.0
      %632 = vmatpush1.msra.mxu0 %v574
      %633 = vmatprep.subr.mxu0 0.0
      %634 = vmatpush1.msra.mxu0 %v573
      %635 = vmatprep.subr.mxu0 0.0
      %636 = vmatpush1.msra.mxu0 %v572
      %637 = vmatprep.subr.mxu0 0.0
      %638 = vmatpush1.msra.mxu0 %v571
      %639 = vmatprep.subr.mxu0 0.0
      %640 = vmatpush1.msra.mxu0 %v570
      %641 = vmatprep.subr.mxu0 0.0
      %642 = vmatpush2.msra.mxu0 %v601
      %643 = vmatprep.subr.mxu0 0.0
      %644 = vmatpush2.msra.mxu0 %v600
      %645 = vmatprep.subr.mxu0 0.0
      %646 = vmatpush2.msra.mxu0 %v599
      %647 = vmatprep.subr.mxu0 0.0
      %648 = vmatpush2.msra.mxu0 %v598
      %649 = vmatprep.subr.mxu0 0.0
      %650 = vmatpush2.msra.mxu0 %v597
      %651 = vmatprep.subr.mxu0 0.0
      %652 = vmatpush2.msra.mxu0 %v596
      %653 = vmatprep.subr.mxu0 0.0
      %654 = vmatpush2.msra.mxu0 %v595
      %655 = vmatprep.subr.mxu0 0.0
      %656 = vmatpush2.msra.mxu0 %v594
      %657 = vmatprep.subr.mxu0 0.0
      %658 = vmatpush2.msra.mxu0 %v593
      %659 = vmatprep.subr.mxu0 0.0
      %660 = vmatpush2.msra.mxu0 %v592
      %661 = vmatprep.subr.mxu0 0.0
      %662 = vmatpush2.msra.mxu0 %v591
      %663 = vmatprep.subr.mxu0 0.0
      %664 = vmatpush2.msra.mxu0 %v590
      %665 = vmatprep.subr.mxu0 0.0
      %666 = vmatpush2.msra.mxu0 %v589
      %667 = vmatprep.subr.mxu0 0.0
      %668 = vmatpush2.msra.mxu0 %v588
      %669 = vmatprep.subr.mxu0 0.0
      %670 = vmatpush2.msra.mxu0 %v587
      %671 = vmatprep.subr.mxu0 0.0
      %672 = vmatpush2.msra.mxu0 %v586
      %673 = vmatprep.mubr.f32.mxu0 %v539
      %674 = vmatmul.mubr.f32.gmra.mxu0 %v538
      %v675 = vpop.f32.mrf.mxu0
      %v676 = vadd.f32 %v607, %v675
      %v677 = vpop.f32.mrf.mxu0
      %678 = vmatprep.mubr.f32.mxu0 %v541
      %679 = vmatmul.mubr.f32.gmra.mxu0 %v540
      %v680 = vpop.f32.mrf.mxu0
      %v681 = vadd.f32 %v607, %v680
      %v682 = vpop.f32.mrf.mxu0
      %683 = vmatprep.mubr.f32.mxu0 %v543
      %684 = vmatmul.mubr.f32.gmra.mxu0 %v542
      %v685 = vpop.f32.mrf.mxu0
      %v686 = vadd.f32 %v607, %v685
      %v687 = vpop.f32.mrf.mxu0
      %688 = vmatprep.mubr.f32.mxu0 %v545
      %689 = vmatmul.mubr.f32.gmra.mxu0 %v544
      %v690 = vpop.f32.mrf.mxu0
      %v691 = vadd.f32 %v607, %v690
      %v692 = vpop.f32.mrf.mxu0
      %693 = vmatprep.mubr.f32.mxu0 %v547
      %694 = vmatmul.mubr.f32.gmra.mxu0 %v546
      %v695 = vpop.f32.mrf.mxu0
      %v696 = vadd.f32 %v607, %v695
      %v697 = vpop.f32.mrf.mxu0
      %698 = vmatprep.mubr.f32.mxu0 %v549
      %699 = vmatmul.mubr.f32.gmra.mxu0 %v548
      %v700 = vpop.f32.mrf.mxu0
      %v701 = vadd.f32 %v607, %v700
      %v702 = vpop.f32.mrf.mxu0
      %703 = vmatprep.mubr.f32.mxu0 %v551
      %704 = vmatmul.mubr.f32.gmra.mxu0 %v550
      %v705 = vpop.f32.mrf.mxu0
      %v706 = vadd.f32 %v607, %v705
      %v707 = vpop.f32.mrf.mxu0
      %708 = vmatprep.mubr.f32.mxu0 %v553
      %709 = vmatmul.mubr.f32.gmra.mxu0 %v552
      %v710 = vpop.f32.mrf.mxu0
      %v711 = vadd.f32 %v607, %v710
      %v712 = vpop.f32.mrf.mxu0
      %713 = vmatprep.mubr.f32.mxu0 %v555
      %714 = vmatmul.mubr.f32.gmra.mxu0 %v554
      %v715 = vpop.f32.mrf.mxu0
      %v716 = vadd.f32 %v607, %v715
      %v717 = vpop.f32.mrf.mxu0
      %718 = vmatprep.mubr.f32.mxu0 %v557
      %719 = vmatmul.mubr.f32.gmra.mxu0 %v556
      %v720 = vpop.f32.mrf.mxu0
      %v721 = vadd.f32 %v607, %v720
      %v722 = vpop.f32.mrf.mxu0
      %723 = vmatprep.mubr.f32.mxu0 %v559
      %724 = vmatmul.mubr.f32.gmra.mxu0 %v558
      %v725 = vpop.f32.mrf.mxu0
      %v726 = vadd.f32 %v607, %v725
      %v727 = vpop.f32.mrf.mxu0
      %728 = vmatprep.mubr.f32.mxu0 %v561
      %729 = vmatmul.mubr.f32.gmra.mxu0 %v560
      %v730 = vpop.f32.mrf.mxu0
      %v731 = vadd.f32 %v607, %v730
      %v732 = vpop.f32.mrf.mxu0
      %733 = vmatprep.mubr.f32.mxu0 %v563
      %734 = vmatmul.mubr.f32.gmra.mxu0 %v562
      %v735 = vpop.f32.mrf.mxu0
      %v736 = vadd.f32 %v607, %v735
      %v737 = vpop.f32.mrf.mxu0
      %738 = vmatprep.mubr.f32.mxu0 %v565
      %739 = vmatmul.mubr.f32.gmra.mxu0 %v564
      %v740 = vpop.f32.mrf.mxu0
      %v741 = vadd.f32 %v607, %v740
      %v742 = vpop.f32.mrf.mxu0
      %743 = vmatprep.mubr.f32.mxu0 %v567
      %744 = vmatmul.mubr.f32.gmra.mxu0 %v566
      %v745 = vpop.f32.mrf.mxu0
      %v746 = vadd.f32 %v607, %v745
      %v747 = vpop.f32.mrf.mxu0
      %748 = vmatprep.mubr.f32.mxu0 %v569
      %749 = vmatmul.mubr.f32.gmra.mxu0 %v568
      %v750 = vpop.f32.mrf.mxu0
      %v751 = vadd.f32 %v607, %v750
      %v752 = vpop.f32.mrf.mxu0
      %753 = vdwg.mxu0
      %v754 = vmul.f32 %v676, 0.01
      %v755 = vmul.f32 %v681, 0.01
      %v756 = vmul.f32 %v686, 0.01
      %v757 = vmul.f32 %v691, 0.01
      %v758 = vmul.f32 %v696, 0.01
      %v759 = vmul.f32 %v701, 0.01
      %v760 = vmul.f32 %v706, 0.01
      %v761 = vmul.f32 %v711, 0.01
      %v762 = vmul.f32 %v716, 0.01
      %v763 = vmul.f32 %v721, 0.01
      %v764 = vmul.f32 %v726, 0.01
      %v765 = vmul.f32 %v731, 0.01
      %v766 = vmul.f32 %v736, 0.01
      %v767 = vmul.f32 %v741, 0.01
      %v768 = vmul.f32 %v746, 0.01
      %v769 = vmul.f32 %v751, 0.01
      %v770 = vmax.f32 %v676, %v754
      %v771 = vmax.f32 %v681, %v755
      %v772 = vmax.f32 %v686, %v756
      %v773 = vmax.f32 %v691, %v757
      %v774 = vmax.f32 %v696, %v758
      %v775 = vmax.f32 %v701, %v759
      %v776 = vmax.f32 %v706, %v760
      %v777 = vmax.f32 %v711, %v761
      %v778 = vmax.f32 %v716, %v762
      %v779 = vmax.f32 %v721, %v763
      %v780 = vmax.f32 %v726, %v764
      %v781 = vmax.f32 %v731, %v765
      %v782 = vmax.f32 %v736, %v766
      %v783 = vmax.f32 %v741, %v767
      %v784 = vmax.f32 %v746, %v768
      %v785 = vmax.f32 %v751, %v769
      %v786 = vld [vmem:[#allocation10] sm:$0xff]
      %v787 = vld [vmem:[#allocation10 + $0x8] sm:$0xff]
      %v788 = vld [vmem:[#allocation10 + $0x10] sm:$0xff]
      %v789 = vld [vmem:[#allocation10 + $0x18] sm:$0xff]
      %v790 = vld [vmem:[#allocation10 + $0x20] sm:$0xff]
      %v791 = vld [vmem:[#allocation10 + $0x28] sm:$0xff]
      %v792 = vld [vmem:[#allocation10 + $0x30] sm:$0xff]
      %v793 = vld [vmem:[#allocation10 + $0x38] sm:$0xff]
      %v794 = vld [vmem:[#allocation10 + $0x40] sm:$0xff]
      %v795 = vld [vmem:[#allocation10 + $0x48] sm:$0xff]
      %v796 = vld [vmem:[#allocation10 + $0x50] sm:$0xff]
      %v797 = vld [vmem:[#allocation10 + $0x58] sm:$0xff]
      %v798 = vld [vmem:[#allocation10 + $0x60] sm:$0xff]
      %v799 = vld [vmem:[#allocation10 + $0x68] sm:$0xff]
      %v800 = vld [vmem:[#allocation10 + $0x70] sm:$0xff]
      %v801 = vld [vmem:[#allocation10 + $0x78] sm:$0xff]
      %v802 = vld [vmem:[%s7] sm:$0x1]
      %v804 = vlaneseq
      %v805 = vshrl.u32 %v804, 7
      %v806 = vsub.s32 0, %v805
      %v807 = vrot.slane %v802, %v806
      %809 = vmatprep.subr.mxu0 0.0
      %810 = vmatpush1.msra.mxu0 %v801
      %811 = vmatprep.subr.mxu0 0.0
      %812 = vmatpush1.msra.mxu0 %v800
      %813 = vmatprep.subr.mxu0 0.0
      %814 = vmatpush1.msra.mxu0 %v799
      %815 = vmatprep.subr.mxu0 0.0
      %816 = vmatpush1.msra.mxu0 %v798
      %817 = vmatprep.subr.mxu0 0.0
      %818 = vmatpush1.msra.mxu0 %v797
      %819 = vmatprep.subr.mxu0 0.0
      %820 = vmatpush1.msra.mxu0 %v796
      %821 = vmatprep.subr.mxu0 0.0
      %822 = vmatpush1.msra.mxu0 %v795
      %823 = vmatprep.subr.mxu0 0.0
      %824 = vmatpush1.msra.mxu0 %v794
      %825 = vmatprep.subr.mxu0 0.0
      %826 = vmatpush1.msra.mxu0 %v793
      %827 = vmatprep.subr.mxu0 0.0
      %828 = vmatpush1.msra.mxu0 %v792
      %829 = vmatprep.subr.mxu0 0.0
      %830 = vmatpush1.msra.mxu0 %v791
      %831 = vmatprep.subr.mxu0 0.0
      %832 = vmatpush1.msra.mxu0 %v790
      %833 = vmatprep.subr.mxu0 0.0
      %834 = vmatpush1.msra.mxu0 %v789
      %835 = vmatprep.subr.mxu0 0.0
      %836 = vmatpush1.msra.mxu0 %v788
      %837 = vmatprep.subr.mxu0 0.0
      %838 = vmatpush1.msra.mxu0 %v787
      %839 = vmatprep.subr.mxu0 0.0
      %840 = vmatpush1.msra.mxu0 %v786
      %841 = vmatprep.subr.mxu0 0.0
      %842 = vmatpush2.msra.mxu0 0.0
      %843 = vmatprep.subr.mxu0 0.0
      %844 = vmatpush2.msra.mxu0 0.0
      %845 = vmatprep.subr.mxu0 0.0
      %846 = vmatpush2.msra.mxu0 0.0
      %847 = vmatprep.subr.mxu0 0.0
      %848 = vmatpush2.msra.mxu0 0.0
      %849 = vmatprep.subr.mxu0 0.0
      %850 = vmatpush2.msra.mxu0 0.0
      %851 = vmatprep.subr.mxu0 0.0
      %852 = vmatpush2.msra.mxu0 0.0
      %853 = vmatprep.subr.mxu0 0.0
      %854 = vmatpush2.msra.mxu0 0.0
      %855 = vmatprep.subr.mxu0 0.0
      %856 = vmatpush2.msra.mxu0 0.0
      %857 = vmatprep.subr.mxu0 0.0
      %858 = vmatpush2.msra.mxu0 0.0
      %859 = vmatprep.subr.mxu0 0.0
      %860 = vmatpush2.msra.mxu0 0.0
      %861 = vmatprep.subr.mxu0 0.0
      %862 = vmatpush2.msra.mxu0 0.0
      %863 = vmatprep.subr.mxu0 0.0
      %864 = vmatpush2.msra.mxu0 0.0
      %865 = vmatprep.subr.mxu0 0.0
      %866 = vmatpush2.msra.mxu0 0.0
      %867 = vmatprep.subr.mxu0 0.0
      %868 = vmatpush2.msra.mxu0 0.0
      %869 = vmatprep.subr.mxu0 0.0
      %870 = vmatpush2.msra.mxu0 0.0
      %871 = vmatprep.subr.mxu0 0.0
      %872 = vmatpush2.msra.mxu0 0.0
      %873 = vmatprep.mubr.f32.mxu0 0.0
      %874 = vmatmul.mubr.f32.gmra.mxu0 %v770
      %v875 = vpop.f32.mrf.mxu0
      %v876 = vadd.f32 %v807, %v875
      %v877 = vpop.f32.mrf.mxu0
      %878 = vmatprep.mubr.f32.mxu0 0.0
      %879 = vmatmul.mubr.f32.gmra.mxu0 %v771
      %v880 = vpop.f32.mrf.mxu0
      %v881 = vadd.f32 %v807, %v880
      %v882 = vpop.f32.mrf.mxu0
      %883 = vmatprep.mubr.f32.mxu0 0.0
      %884 = vmatmul.mubr.f32.gmra.mxu0 %v772
      %v885 = vpop.f32.mrf.mxu0
      %v886 = vadd.f32 %v807, %v885
      %v887 = vpop.f32.mrf.mxu0
      %888 = vmatprep.mubr.f32.mxu0 0.0
      %889 = vmatmul.mubr.f32.gmra.mxu0 %v773
      %v890 = vpop.f32.mrf.mxu0
      %v891 = vadd.f32 %v807, %v890
      %v892 = vpop.f32.mrf.mxu0
      %893 = vmatprep.mubr.f32.mxu0 0.0
      %894 = vmatmul.mubr.f32.gmra.mxu0 %v774
      %v895 = vpop.f32.mrf.mxu0
      %v896 = vadd.f32 %v807, %v895
      %v897 = vpop.f32.mrf.mxu0
      %898 = vmatprep.mubr.f32.mxu0 0.0
      %899 = vmatmul.mubr.f32.gmra.mxu0 %v775
      %v900 = vpop.f32.mrf.mxu0
      %v901 = vadd.f32 %v807, %v900
      %v902 = vpop.f32.mrf.mxu0
      %903 = vmatprep.mubr.f32.mxu0 0.0
      %904 = vmatmul.mubr.f32.gmra.mxu0 %v776
      %v905 = vpop.f32.mrf.mxu0
      %v906 = vadd.f32 %v807, %v905
      %v907 = vpop.f32.mrf.mxu0
      %908 = vmatprep.mubr.f32.mxu0 0.0
      %909 = vmatmul.mubr.f32.gmra.mxu0 %v777
      %v910 = vpop.f32.mrf.mxu0
      %v911 = vadd.f32 %v807, %v910
      %v912 = vpop.f32.mrf.mxu0
      %913 = vmatprep.mubr.f32.mxu0 0.0
      %914 = vmatmul.mubr.f32.gmra.mxu0 %v778
      %v915 = vpop.f32.mrf.mxu0
      %v916 = vadd.f32 %v807, %v915
      %v917 = vpop.f32.mrf.mxu0
      %918 = vmatprep.mubr.f32.mxu0 0.0
      %919 = vmatmul.mubr.f32.gmra.mxu0 %v779
      %v920 = vpop.f32.mrf.mxu0
      %v921 = vadd.f32 %v807, %v920
      %v922 = vpop.f32.mrf.mxu0
      %923 = vmatprep.mubr.f32.mxu0 0.0
      %924 = vmatmul.mubr.f32.gmra.mxu0 %v780
      %v925 = vpop.f32.mrf.mxu0
      %v926 = vadd.f32 %v807, %v925
      %v927 = vpop.f32.mrf.mxu0
      %928 = vmatprep.mubr.f32.mxu0 0.0
      %929 = vmatmul.mubr.f32.gmra.mxu0 %v781
      %v930 = vpop.f32.mrf.mxu0
      %v931 = vadd.f32 %v807, %v930
      %v932 = vpop.f32.mrf.mxu0
      %933 = vmatprep.mubr.f32.mxu0 0.0
      %934 = vmatmul.mubr.f32.gmra.mxu0 %v782
      %v935 = vpop.f32.mrf.mxu0
      %v936 = vadd.f32 %v807, %v935
      %v937 = vpop.f32.mrf.mxu0
      %938 = vmatprep.mubr.f32.mxu0 0.0
      %939 = vmatmul.mubr.f32.gmra.mxu0 %v783
      %v940 = vpop.f32.mrf.mxu0
      %v941 = vadd.f32 %v807, %v940
      %v942 = vpop.f32.mrf.mxu0
      %943 = vmatprep.mubr.f32.mxu0 0.0
      %944 = vmatmul.mubr.f32.gmra.mxu0 %v784
      %v945 = vpop.f32.mrf.mxu0
      %v946 = vadd.f32 %v807, %v945
      %v947 = vpop.f32.mrf.mxu0
      %948 = vmatprep.mubr.f32.mxu0 0.0
      %949 = vmatmul.mubr.f32.gmra.mxu0 %v785
      %v950 = vpop.f32.mrf.mxu0
      %v951 = vadd.f32 %v807, %v950
      %v952 = vpop.f32.mrf.mxu0
      %953 = vdwg.mxu0
      %s954 = sld [smem:[#allocation3]]
      %v955 = vstv %s954
      %v956 = vmul.f32 %v876, %v955
      %v957 = vmul.f32 %v881, %v955
      %v958 = vmul.f32 %v886, %v955
      %v959 = vmul.f32 %v891, %v955
      %v960 = vmul.f32 %v896, %v955
      %v961 = vmul.f32 %v901, %v955
      %v962 = vmul.f32 %v906, %v955
      %v963 = vmul.f32 %v911, %v955
      %v964 = vmul.f32 %v916, %v955
      %v965 = vmul.f32 %v921, %v955
      %v966 = vmul.f32 %v926, %v955
      %v967 = vmul.f32 %v931, %v955
      %v968 = vmul.f32 %v936, %v955
      %v969 = vmul.f32 %v941, %v955
      %v970 = vmul.f32 %v946, %v955
      %v971 = vmul.f32 %v951, %v955
      %972 = vst [vmem:[#allocation12] sm:$0xff] %v956
      %973 = vst [vmem:[#allocation12 + $0x8] sm:$0xff] %v957
      %974 = vst [vmem:[#allocation12 + $0x10] sm:$0xff] %v958
      %975 = vst [vmem:[#allocation12 + $0x18] sm:$0xff] %v959
      %976 = vst [vmem:[#allocation12 + $0x20] sm:$0xff] %v960
      %977 = vst [vmem:[#allocation12 + $0x28] sm:$0xff] %v961
      %978 = vst [vmem:[#allocation12 + $0x30] sm:$0xff] %v962
      %979 = vst [vmem:[#allocation12 + $0x38] sm:$0xff] %v963
      %980 = vst [vmem:[#allocation12 + $0x40] sm:$0xff] %v964
      %981 = vst [vmem:[#allocation12 + $0x48] sm:$0xff] %v965
      %982 = vst [vmem:[#allocation12 + $0x50] sm:$0xff] %v966
      %983 = vst [vmem:[#allocation12 + $0x58] sm:$0xff] %v967
      %984 = vst [vmem:[#allocation12 + $0x60] sm:$0xff] %v968
      %985 = vst [vmem:[#allocation12 + $0x68] sm:$0xff] %v969
      %986 = vst [vmem:[#allocation12 + $0x70] sm:$0xff] %v970
      %987 = vst [vmem:[#allocation12 + $0x78] sm:$0xff] %v971
    $region57: #{tpu_custom_call.1} parent=1 // pred_fallthru
      _
    // Predicated region
    $region58: #{tpu_custom_call.1} parent=1 // pred_check
      _
    $region59: #{tpu_custom_call.1} parent=1 // pred_check_branch
      %989 = sbr.rel (0) target = $region61
    $region60: #{tpu_custom_call.1} parent=1 // pred_region
      %s991 = ssub.s32 2048, 2048
      %992 = vsyncadd [#allocation6], %s991
      %s993 = sshll.u32 [#allocation12], 4
      %s994 = int_to_ptr.vmem [resolvable:$true] %s993
      %999 = dma.vmem_to_hbm [thread:$0]  %s994, 2048, %s8, [#allocation6], 128, 128, 8
    $region61: #{tpu_custom_call.1} parent=1 // pred_fallthru
      _
    // Predicated region
    $region62: #{tpu_custom_call.1} parent=1 // pred_check
      _
    $region63: #{tpu_custom_call.1} parent=1 // pred_check_branch
      %1001 = sbr.rel (0) target = $region65
    $region64: #{tpu_custom_call.1} parent=1 // pred_region
      %1002 = dma.done [#allocation6], 2048
    $region65: #{tpu_custom_call.1} parent=1 // pred_fallthru
      _
    %1003 = vsyncpa [#allocation5], 1
    %1004 = vsyncpa [#allocation8], 1
    %1005 = vsyncpa [#allocation11], 1
    %1006 = vsyncpa [#allocation6], 1

</llo_original>
